<compile_context>
chip_gen: v7x
topology: tpu7x:2x2x1
jax: 0.10.0
libtpu: 0.0.40
codegen_flags: <defaults>
</compile_context>

<pallas_src>
import jax
import jax.numpy as jnp
from jax.experimental import pallas as pl
from jax.experimental.pallas import tpu as pltpu


def _round_up(x, m):
    return ((x + m - 1) // m) * m


# ---------------------------------------------------------------------------
# Per-generation VMEM sizing
# ---------------------------------------------------------------------------
def _vmem_physical_bytes():
    phys = 64 << 20  # conservative default = v7x per-TensorCore VMEM
    try:
        info = pltpu.get_tpu_info()
        for attr in ("vmem_capacity_bytes", "vmem_bytes", "vmem_size_bytes"):
            v = getattr(info, attr, None)
            if v:
                phys = int(v)
                break
    except Exception:
        pass  # query unavailable -> keep conservative default
    return phys


def _vmem_budget(phys):
    # Working-set cap for our buffers: <= 40% of physical VMEM (~25 MiB on
    # v7x's 64 MiB/TC, ~51 MiB on v5e/v6e's 128 MiB), leaving headroom for the
    # compiler's internal scratch and the pipeline machinery.
    return min(int(phys * 0.4), 96 << 20)


def _vmem_limit_bytes(working_set, phys):
    # Explicit scoped-VMEM limit: 2x the estimated working set, >= 32 MiB,
    # never above 80% of physical (works on v5e where the default scoped
    # limit is only 16 MiB, and on v7x's 64 MiB ceiling).
    limit = max(32 << 20, int(working_set) * 2)
    limit = min(limit, int(phys * 0.8))
    return _round_up(limit, 1 << 20)


def _pick_tile(requested, n, per_row_bytes, fixed_bytes, budget_bytes):
    """Rows of ids per grid step: large enough to amortize ~0.35us/step and
    keep the MXU fed, small enough to fit the VMEM budget; never over-pads a
    tiny problem."""
    tile = max(8, min(int(requested), _round_up(max(int(n), 1), 8)))
    tile = _round_up(tile, 8)
    while tile > 8 and fixed_bytes + tile * per_row_bytes > budget_bytes:
        tile = _round_up(tile // 2, 8)
    return tile


# ---------------------------------------------------------------------------
# Path 1: one-hot matmul gather on the MXU (small/medium tables)
# ---------------------------------------------------------------------------
def _onehot_gather_kernel(ids_ref, planes_ref, out_ref):
    # ids_ref:    (TILE, 1)          int32  VMEM
    # planes_ref: (P, K_PAD, D_PAD)  bf16   VMEM (constant block: exact bf16
    #             hi/mid/lo planes of the f32 table, or a single bf16 plane)
    # out_ref:    (TILE, D_PAD)      f32    VMEM (lane-dense: D_PAD % 128 == 0)
    ids = ids_ref[...]
    tile = ids.shape[0]
    n_planes, k_pad, _ = planes_ref.shape
    # NOTE: iota is NOT hoisted to a pl.when(program_id==0)-initialized scratch
    # on purpose: with dimension_semantics=("parallel",) only one core runs
    # grid step 0, so such an init would be wrong under megacore sharding.
    iota = jax.lax.broadcasted_iota(jnp.int32, (tile, k_pad), 1)
    # bf16 one-hot: 0/1 are exact in bf16; halves the (TILE, K_PAD) temporary
    # and feeds the MXU a single-pass operand.
    onehot = (iota == ids).astype(jnp.bfloat16)
    # One single-pass bf16 matmul per plane, f32 accumulation.  One non-zero
    # per contraction row + (hi + mid) + lo summation order => bit-exact f32
    # row reconstruction.
    acc = jnp.dot(onehot, planes_ref[0], preferred_element_type=jnp.float32)
    for p in range(1, n_planes):
        acc = acc + jnp.dot(onehot, planes_ref[p],
                            preferred_element_type=jnp.float32)
    out_ref[...] = acc


def _split_table_planes(tab_f32, exact):
    """Exact 3-way bf16 split of an f32 table: hi + mid + lo == tab."""
    hi = tab_f32.astype(jnp.bfloat16)
    if not exact:
        return jnp.stack([hi])
    r1 = tab_f32 - hi.astype(jnp.float32)
    mid = r1.astype(jnp.bfloat16)
    r2 = r1 - mid.astype(jnp.float32)
    lo = r2.astype(jnp.bfloat16)
    return jnp.stack([hi, mid, lo])


def _onehot_path(ids_flat, table_f32, tile_req, exact, budget, phys):
    n = int(ids_flat.shape[0])
    max_len, d_model = table_f32.shape
    # Pad rows/cols to multiples of 128 (MXU-friendly K, lane-dense stores).
    # For real configs (d_model % 128 == 0) the D padding is a no-op; narrow
    # embeddings pay write amplification here -> prefer path="dma" for those.
    k_pad = _round_up(max_len, 128)
    d_pad = _round_up(d_model, 128)
    tab = table_f32
    if (k_pad, d_pad) != (max_len, d_model):
        tab = jnp.pad(tab, ((0, k_pad - max_len), (0, d_pad - d_model)))
    planes = _split_table_planes(tab, exact)          # (P, k_pad, d_pad) bf16
    n_planes = int(planes.shape[0])

    # VMEM accounting (bytes): planes double-buffered (constant block) +
    # per-row working set (ids & out double-buffered, bf16 one-hot, f32 acc).
    fixed = 2 * n_planes * k_pad * d_pad * 2
    per_row = 2 * 4 + 2 * d_pad * 4 + k_pad * 2 + d_pad * 4
    tile = _pick_tile(tile_req, n, per_row, fixed, budget)
    n_pad = _round_up(n, tile)
    ids_col = jnp.pad(ids_flat, (0, n_pad - n)).reshape(n_pad, 1)

    working_set = fixed + tile * per_row
    vmem_limit = _vmem_limit_bytes(working_set, phys)

    # flops reflects the actual MXU pass count (n_planes single-pass matmuls).
    cost = pl.CostEstimate(
        flops=n_planes * 2 * n_pad * k_pad * d_pad,
        transcendentals=0,
        bytes_accessed=4 * n_pad + n_planes * 2 * k_pad * d_pad
        + 4 * n_pad * d_pad,
    )

    call = pl.pallas_call(
        _onehot_gather_kernel,
        out_shape=jax.ShapeDtypeStruct((n_pad, d_pad), jnp.float32),
        grid_spec=pltpu.PrefetchScalarGridSpec(
            num_scalar_prefetch=0,
            grid=(n_pad // tile,),
            in_specs=[
                pl.BlockSpec((tile, 1), lambda i: (i, 0)),
                pl.BlockSpec((n_planes, k_pad, d_pad), lambda i: (0, 0, 0)),
            ],
            out_specs=pl.BlockSpec((tile, d_pad), lambda i: (i, 0)),
        ),
        compiler_params=pltpu.CompilerParams(
            dimension_semantics=("parallel",),
            vmem_limit_bytes=vmem_limit,
        ),
        cost_estimate=cost,
    )
    out = call(ids_col, planes)
    return out[:n, :d_model]


# ---------------------------------------------------------------------------
# Path 2: scalar-prefetch DMA gather (large tables / narrow d_model)
# ---------------------------------------------------------------------------
_DMA_SLOTS = 8  # outstanding row copies per grid step


def _make_dma_gather_kernel(tile, slots):
    def kernel(ids_ref, table_hbm, out_ref, buf_ref, sem):
        # ids_ref:   (N_PAD,)        int32  SMEM (scalar-prefetched ids)
        # table_hbm: (MAX_LEN, D)    f32    HBM (pl.ANY)
        # out_ref:   (TILE, D)       f32    VMEM output block
        # buf_ref:   (TILE, D)       f32    VMEM scratch (DMA landing buffer)
        # sem:       (SLOTS,)        DMA semaphores
        base = pl.program_id(0) * tile

        def copy(r):
            row = ids_ref[base + r]
            return pltpu.make_async_copy(
                table_hbm.at[pl.ds(row, 1)],
                buf_ref.at[pl.ds(r, 1)],
                sem.at[r % slots],
            )

        @pl.loop(0, tile)
        def _(r):
            # Keep at most `slots` copies in flight; free the slot first.
            @pl.when(r >= slots)
            def _():
                copy(r - slots).wait()

            copy(r).start()

        @pl.loop(0, slots)
        def _(j):
            copy(tile - slots + j).wait()

        out_ref[...] = buf_ref[...]

    return kernel


def _dma_path(ids_flat, table_f32, tile_req, budget, phys):
    n = int(ids_flat.shape[0])
    max_len, d_model = table_f32.shape
    slots = _DMA_SLOTS

    # No table residency in VMEM and no D padding: rows are copied verbatim
    # and the output block covers the full last dim.
    per_row = 2 * d_model * 4 + d_model * 4   # out block (x2 bufs) + scratch
    tile = _pick_tile(tile_req, n, per_row, 0, budget)
    n_pad = _round_up(n, tile)
    # Padding ids with 0 gathers row 0 (always a valid HBM read); sliced off.
    ids_pad = jnp.pad(ids_flat, (0, n_pad - n))

    working_set = tile * per_row
    vmem_limit = _vmem_limit_bytes(working_set, phys)

    cost = pl.CostEstimate(
        flops=0,
        transcendentals=0,
        bytes_accessed=4 * n_pad + 2 * 4 * n_pad * d_model,
    )

    call = pl.pallas_call(
        _make_dma_gather_kernel(tile, slots),
        out_shape=jax.ShapeDtypeStruct((n_pad, d_model), jnp.float32),
        grid_spec=pltpu.PrefetchScalarGridSpec(
            num_scalar_prefetch=1,
            grid=(n_pad // tile,),
            in_specs=[pl.BlockSpec(memory_space=pl.ANY)],
            out_specs=pl.BlockSpec((tile, d_model), lambda i, ids: (i, 0)),
            scratch_shapes=[
                pltpu.VMEM((tile, d_model), jnp.float32),
                pltpu.SemaphoreType.DMA((slots,)),
            ],
        ),
        compiler_params=pltpu.CompilerParams(
            dimension_semantics=("parallel",),
            vmem_limit_bytes=vmem_limit,
        ),
        cost_estimate=cost,
    )
    out = call(ids_pad, table_f32)
    return out[:n, :]


# ---------------------------------------------------------------------------
# Public wrapper: NodeIdEmbedding.forward
# ---------------------------------------------------------------------------
def node_id_embedding(node_ids, ne, *, tile=512, path="auto", exact=True):
    """Pallas equivalent of NodeIdEmbedding.forward: ne[node_ids].

    node_ids: int array of arbitrary shape, values in [0, max_len)
    ne:       (max_len, d_model) float32 embedding table
    path:     "auto" | "onehot" | "dma"
    exact:    onehot path only; True -> exact f32 gather via 3 bf16 planes,
              False -> single-pass bf16 table (explicit precision tradeoff)
    returns:  node_ids.shape + (d_model,) float32
    """
    max_len, d_model = ne.shape
    orig_shape = node_ids.shape
    ids_flat = node_ids.reshape(-1).astype(jnp.int32)
    n = int(ids_flat.shape[0])
    if n == 0:
        return jnp.zeros(orig_shape + (d_model,), jnp.float32)

    phys = _vmem_physical_bytes()
    budget = _vmem_budget(phys)
    table_f32 = ne.astype(jnp.float32)

    if path == "auto":
        k_pad = _round_up(max_len, 128)
        d_pad = _round_up(d_model, 128)
        n_planes = 3 if exact else 1
        planes_resident = 2 * n_planes * k_pad * d_pad * 2
        # One-hot MXU path only while the resident planes are a small fraction
        # of the budget and the O(N*K*D) flop cost stays reasonable; otherwise
        # fall back to the HBM-bandwidth-bound DMA gather.
        path = "onehot" if (planes_resident <= budget // 3 and k_pad <= 4096) \
            else "dma"

    if path == "onehot":
        out = _onehot_path(ids_flat, table_f32, tile, exact, budget, phys)
    elif path == "dma":
        out = _dma_path(ids_flat, table_f32, tile, budget, phys)
    else:
        raise ValueError(f"unknown path: {path!r}")

    return out.reshape(orig_shape + (d_model,))


def make_orthogonal_table(key, max_len, d_model):
    """Deterministic stand-in for torch.nn.init.orthogonal_ on (max_len, d_model)."""
    a = jax.random.normal(key, (max_len, d_model), dtype=jnp.float32)
    q, r = jnp.linalg.qr(a)
    d = jnp.sign(jnp.diagonal(r))
    d = jnp.where(d == 0, 1.0, d)
    return (q * d[None, :]).astype(jnp.float32)


if __name__ == "__main__":
    key = jax.random.PRNGKey(0)
    k_ne, k_ids = jax.random.split(key)

    max_len = 64    # module default is 512; small synthetic config
    d_model = 32

    ne = make_orthogonal_table(k_ne, max_len, d_model)
    node_ids = jax.random.randint(k_ids, (2, 8), 0, max_len, dtype=jnp.int32)
    ref = ne[node_ids]

    # MXU one-hot path (exact 3x bf16-plane reconstruction of the f32 table).
    out_mxu = jax.block_until_ready(node_id_embedding(node_ids, ne, path="onehot"))
    assert out_mxu.shape == (2, 8, d_model), out_mxu.shape
    assert jnp.allclose(out_mxu, ref, rtol=1e-6, atol=1e-7), "onehot path mismatch"

    # Scalar-prefetch DMA-gather path (bitwise-exact row copies).
    out_dma = jax.block_until_ready(node_id_embedding(node_ids, ne, path="dma"))
    assert out_dma.shape == (2, 8, d_model), out_dma.shape
    assert bool(jnp.array_equal(out_dma, ref)), "dma path mismatch"

    # Auto path selection.
    out_auto = jax.block_until_ready(node_id_embedding(node_ids, ne))
    assert jnp.allclose(out_auto, ref, rtol=1e-6, atol=1e-7), "auto path mismatch"

    print("KERNEL_OK")
</pallas_src>

<mosaic_0001>
module attributes {stable_mosaic.version = 11 : i64} {
  func.func @_onehot_gather_kernel(%arg0: i32, %arg1: memref<16x1xi32, #tpu.memory_space<vmem>>, %arg2: memref<3x128x128xbf16, #tpu.memory_space<vmem>>, %arg3: memref<16x128xf32, #tpu.memory_space<vmem>>) attributes {dimension_semantics = [#tpu.dimension_semantics<parallel>], iteration_bounds = array<i64: 1>, scalar_prefetch = 0 : i64, scratch_operands = 0 : i64, tpu.core_type = #tpu.core_type<tc>, window_params = [{transform_indices = @transform_0, window_bounds = array<i64: 16, 1>}, {pipeline_mode = #tpu.pipeline_mode<synchronous>, transform_indices = @transform_1, window_bounds = array<i64: 3, 128, 128>}, {transform_indices = @transform_2, window_bounds = array<i64: 16, 128>}]} {
    %c0 = arith.constant 0 : index
    %c0_0 = arith.constant 0 : index
    %0 = vector.load %arg1[%c0, %c0_0] : memref<16x1xi32, #tpu.memory_space<vmem>>, vector<16x1xi32>
    %1 = tpu.iota {dimensions = array<i32: 1>} : vector<16x128xi32>
    %2 = vector.broadcast %0 : vector<16x1xi32> to vector<16x128xi32>
    %3 = arith.cmpi eq, %1, %2 : vector<16x128xi32>
    %4 = arith.extui %3 : vector<16x128xi1> to vector<16x128xi32>
    %5 = arith.sitofp %4 : vector<16x128xi32> to vector<16x128xf32>
    %6 = arith.truncf %5 : vector<16x128xf32> to vector<16x128xbf16>
    %c0_1 = arith.constant 0 : index
    %c0_2 = arith.constant 0 : index
    %c0_3 = arith.constant 0 : index
    %7 = vector.load %arg2[%c0_1, %c0_2, %c0_3] : memref<3x128x128xbf16, #tpu.memory_space<vmem>>, vector<1x128x128xbf16>
    %8 = vector.shape_cast %7 : vector<1x128x128xbf16> to vector<128x128xbf16>
    %cst = arith.constant dense<0.000000e+00> : vector<16x128xf32>
    %9 = tpu.matmul %6, %8, %cst {dimension_numbers = #tpu.dot_dimension_numbers<[1], [0], [0], [1], [0, 0, 1, 1], [], []>} : vector<16x128xbf16>, vector<128x128xbf16>, vector<16x128xf32> -> vector<16x128xf32>
    %c1 = arith.constant 1 : index
    %c0_4 = arith.constant 0 : index
    %c0_5 = arith.constant 0 : index
    %10 = vector.load %arg2[%c1, %c0_4, %c0_5] : memref<3x128x128xbf16, #tpu.memory_space<vmem>>, vector<1x128x128xbf16>
    %11 = vector.shape_cast %10 : vector<1x128x128xbf16> to vector<128x128xbf16>
    %cst_6 = arith.constant dense<0.000000e+00> : vector<16x128xf32>
    %12 = tpu.matmul %6, %11, %cst_6 {dimension_numbers = #tpu.dot_dimension_numbers<[1], [0], [0], [1], [0, 0, 1, 1], [], []>} : vector<16x128xbf16>, vector<128x128xbf16>, vector<16x128xf32> -> vector<16x128xf32>
    %13 = arith.addf %9, %12 : vector<16x128xf32>
    %c2 = arith.constant 2 : index
    %c0_7 = arith.constant 0 : index
    %c0_8 = arith.constant 0 : index
    %14 = vector.load %arg2[%c2, %c0_7, %c0_8] : memref<3x128x128xbf16, #tpu.memory_space<vmem>>, vector<1x128x128xbf16>
    %15 = vector.shape_cast %14 : vector<1x128x128xbf16> to vector<128x128xbf16>
    %cst_9 = arith.constant dense<0.000000e+00> : vector<16x128xf32>
    %16 = tpu.matmul %6, %15, %cst_9 {dimension_numbers = #tpu.dot_dimension_numbers<[1], [0], [0], [1], [0, 0, 1, 1], [], []>} : vector<16x128xbf16>, vector<128x128xbf16>, vector<16x128xf32> -> vector<16x128xf32>
    %17 = arith.addf %13, %16 : vector<16x128xf32>
    %c0_10 = arith.constant 0 : index
    %c0_11 = arith.constant 0 : index
    %18 = vector.load %arg3[%c0_10, %c0_11] : memref<16x128xf32, #tpu.memory_space<vmem>>, vector<16x128xf32>
    tpu.vector_store %arg3[%c0_10, %c0_11], %17 {strides = array<i32>} : memref<16x128xf32, #tpu.memory_space<vmem>>, vector<16x128xf32>,
    return
  }
  func.func @transform_0(%arg0: i32) -> (i32, i32) {
    %c0_i32 = arith.constant 0 : i32
    %c0_i32_0 = arith.constant 0 : i32
    return %arg0, %c0_i32 : i32, i32
  }
  func.func @transform_1(%arg0: i32) -> (i32, i32, i32) {
    %c0_i32 = arith.constant 0 : i32
    %c0_i32_0 = arith.constant 0 : i32
    %c0_i32_1 = arith.constant 0 : i32
    %c0_i32_2 = arith.constant 0 : i32
    return %c0_i32, %c0_i32_0, %c0_i32_1 : i32, i32, i32
  }
  func.func @transform_2(%arg0: i32) -> (i32, i32) {
    %c0_i32 = arith.constant 0 : i32
    %c0_i32_0 = arith.constant 0 : i32
    return %arg0, %c0_i32 : i32, i32
  }
}

</mosaic_0001>

<llo_original>
// kernel: tpu_custom_call.1
$region0: #{tpu_custom_call.1}
  #allocation0 [shape = 'u32[]', space=smem, size = 0x4, offset = 0x4, fixed_abs, tag = 'smem constant byte address 0x4 - core index']
  #allocation1 [shape = 'u32[144,128]{1,0:T(1,128)}', space=vmem, size = 0x12000, scoped, tag = 'internal scratch']
  %s0 = inlined_call_operand.vmem [shape: s32[16,1], index: 0, kind: input, shape index: {}]
  %s1 = inlined_call_operand.hbm [shape: bf16[3,128,128], index: 1, kind: input, shape index: {}]
  %s2 = inlined_call_operand.hbm [shape: f32[16,128], index: 2, kind: output, shape index: {}]
  %s3 = sld [smem:[#allocation0]]
  $region22: #{tpu_custom_call.1} parent=0
    _
  %s5 = ssub.s32 1, %s3
  %s6 = scalar_select 0, %s5, %s3
  $region1: #{tpu_custom_call.1} parent=0
    #allocation2 [shape = 'u8[98304]{0}', space=vmem, size = 0x18000, scoped, tag = 'input window, operand 1, single buffered']
    #allocation3 [shape = 's32[1]{0}', space=sflag, size = 0x4, scoped, tag = 'scoped memory for tpu_custom_call.1']
    #allocation4 [shape = 's32[1]{0}', space=sflag, size = 0x4, scoped, tag = 'scoped memory for tpu_custom_call.1']
    #allocation5 [shape = 'u8[8192]{0}', space=vmem, size = 0x2000, scoped, tag = 'output window, operand 0, single buffered']
    %7 = vsyncpa [#allocation3], 0
    %8 = vsyncpa [#allocation4], 0
    // Predicated region
    $region2: #{tpu_custom_call.1} parent=1 // pred_check
      _
    $region3: #{tpu_custom_call.1} parent=1 // pred_check_branch
      %10 = sbr.rel (0) target = $region5
    $region4: #{tpu_custom_call.1} parent=1 // pred_region
      _
    $region5: #{tpu_custom_call.1} parent=1 // pred_fallthru
      _
    // Predicated region
    $region6: #{tpu_custom_call.1} parent=1 // pred_check
      _
    $region7: #{tpu_custom_call.1} parent=1 // pred_check_branch
      %12 = sbr.rel (0) target = $region9
    $region8: #{tpu_custom_call.1} parent=1 // pred_region
      %s14 = ssub.s32 3072, 3072
      %15 = vsyncadd [#allocation3], %s14
      %s16 = sshll.u32 [#allocation2], 4
      %s17 = int_to_ptr.vmem [resolvable:$true] %s16
      %22 = dma.hbm_to_vmem [thread:$0]  %s1, 3072, %s17, [#allocation3], 64, 64, 4
    $region9: #{tpu_custom_call.1} parent=1 // pred_fallthru
      _
    // Predicated region
    $region10: #{tpu_custom_call.1} parent=1 // pred_check
      _
    $region11: #{tpu_custom_call.1} parent=1 // pred_check_branch
      %24 = sbr.rel (0) target = $region13
    $region12: #{tpu_custom_call.1} parent=1 // pred_region
      %25 = dma.done [#allocation3], 3072
    $region13: #{tpu_custom_call.1} parent=1 // pred_fallthru
      _
    %v27 = vld [vmem:[%s0] sm:$0xff]
    %v28 = vld [vmem:[%s0 + $0x8] sm:$0xff]
    %v29 = vlaneseq
    %v30 = vand.u32 %v29, 127
    %31 = vset.pattern.permute.xlu0 0
    %32 = vperm.xlu0 %31, %v27
    %v33 = vpop.permute.xlu0 %32
    %34 = vset.pattern.permute.xlu0 0
    %35 = vperm.xlu0 %34, %v28
    %v36 = vpop.permute.xlu0 %35
    %vm37 = vcmp.eq.s32.totalorder %v30, %v33
    %vm38 = vcmp.eq.s32.totalorder %v30, %v36
    %v39 = vsel %vm37, 1, 0
    %v40 = vsel %vm38, 1, 0
    %v41 = vcvt.s32.f32 %v39
    %v42 = vcvt.s32.f32 %v40
    %v43 = vpack.c.bf16 %v42, %v41
    %v44 = vld [vmem:[#allocation2] sm:$0xf]
    %v45 = vld [vmem:[#allocation2 + $0x4] sm:$0xf]
    %v46 = vld [vmem:[#allocation2 + $0x8] sm:$0xf]
    %v47 = vld [vmem:[#allocation2 + $0xc] sm:$0xf]
    %v48 = vld [vmem:[#allocation2 + $0x10] sm:$0xf]
    %v49 = vld [vmem:[#allocation2 + $0x14] sm:$0xf]
    %v50 = vld [vmem:[#allocation2 + $0x18] sm:$0xf]
    %v51 = vld [vmem:[#allocation2 + $0x1c] sm:$0xf]
    %v52 = vld [vmem:[#allocation2 + $0x20] sm:$0xf]
    %v53 = vld [vmem:[#allocation2 + $0x24] sm:$0xf]
    %v54 = vld [vmem:[#allocation2 + $0x28] sm:$0xf]
    %v55 = vld [vmem:[#allocation2 + $0x2c] sm:$0xf]
    %v56 = vld [vmem:[#allocation2 + $0x30] sm:$0xf]
    %v57 = vld [vmem:[#allocation2 + $0x34] sm:$0xf]
    %v58 = vld [vmem:[#allocation2 + $0x38] sm:$0xf]
    %v59 = vld [vmem:[#allocation2 + $0x3c] sm:$0xf]
    %s60 = scalar_lea.vmem [#allocation2], 64
    %v61 = vld [vmem:[%s60] sm:$0xf]
    %v62 = vld [vmem:[%s60 + $0x4] sm:$0xf]
    %v63 = vld [vmem:[%s60 + $0x8] sm:$0xf]
    %v64 = vld [vmem:[%s60 + $0xc] sm:$0xf]
    %v65 = vld [vmem:[%s60 + $0x10] sm:$0xf]
    %v66 = vld [vmem:[%s60 + $0x14] sm:$0xf]
    %v67 = vld [vmem:[%s60 + $0x18] sm:$0xf]
    %v68 = vld [vmem:[%s60 + $0x1c] sm:$0xf]
    %v69 = vld [vmem:[%s60 + $0x20] sm:$0xf]
    %v70 = vld [vmem:[%s60 + $0x24] sm:$0xf]
    %v71 = vld [vmem:[%s60 + $0x28] sm:$0xf]
    %v72 = vld [vmem:[%s60 + $0x2c] sm:$0xf]
    %v73 = vld [vmem:[%s60 + $0x30] sm:$0xf]
    %v74 = vld [vmem:[%s60 + $0x34] sm:$0xf]
    %v75 = vld [vmem:[%s60 + $0x38] sm:$0xf]
    %v76 = vld [vmem:[%s60 + $0x3c] sm:$0xf]
    %v93 = vunpack.c.l.b16 %v61
    %v94 = vunpack.c.l.b16 %v62
    %v95 = vunpack.c.l.b16 %v63
    %v96 = vunpack.c.l.b16 %v64
    %v97 = vunpack.c.l.b16 %v65
    %v98 = vunpack.c.l.b16 %v66
    %v99 = vunpack.c.l.b16 %v67
    %v100 = vunpack.c.l.b16 %v68
    %v101 = vunpack.c.l.b16 %v69
    %v102 = vunpack.c.l.b16 %v70
    %v103 = vunpack.c.l.b16 %v71
    %v104 = vunpack.c.l.b16 %v72
    %v105 = vunpack.c.l.b16 %v73
    %v106 = vunpack.c.l.b16 %v74
    %v107 = vunpack.c.l.b16 %v75
    %v108 = vunpack.c.l.b16 %v76
    %v109 = vpack.c.b16 %v94, %v93
    %v110 = vpack.c.b16 %v96, %v95
    %v111 = vpack.c.b16 %v98, %v97
    %v112 = vpack.c.b16 %v100, %v99
    %v113 = vpack.c.b16 %v102, %v101
    %v114 = vpack.c.b16 %v104, %v103
    %v115 = vpack.c.b16 %v106, %v105
    %v116 = vpack.c.b16 %v108, %v107
    %125 = vmatprep.subr.bf16.mxu0 0
    %126 = vmatpush1.bf16.msra.mxu0 %v109
    %127 = vmatprep.subr.bf16.mxu0 0
    %128 = vmatpush1.bf16.msra.mxu0 %v110
    %129 = vmatprep.subr.bf16.mxu0 0
    %130 = vmatpush1.bf16.msra.mxu0 %v111
    %131 = vmatprep.subr.bf16.mxu0 0
    %132 = vmatpush1.bf16.msra.mxu0 %v112
    %133 = vmatprep.subr.bf16.mxu0 0
    %134 = vmatpush1.bf16.msra.mxu0 %v113
    %135 = vmatprep.subr.bf16.mxu0 0
    %136 = vmatpush1.bf16.msra.mxu0 %v114
    %137 = vmatprep.subr.bf16.mxu0 0
    %138 = vmatpush1.bf16.msra.mxu0 %v115
    %139 = vmatprep.subr.bf16.mxu0 0
    %140 = vmatpush1.bf16.msra.mxu0 %v116
    %141 = vmatprep.subr.bf16.mxu0 0
    %142 = vmatpush1.bf16.msra.mxu0 0
    %143 = vmatprep.subr.bf16.mxu0 0
    %144 = vmatpush1.bf16.msra.mxu0 0
    %145 = vmatprep.subr.bf16.mxu0 0
    %146 = vmatpush1.bf16.msra.mxu0 0
    %147 = vmatprep.subr.bf16.mxu0 0
    %148 = vmatpush1.bf16.msra.mxu0 0
    %149 = vmatprep.subr.bf16.mxu0 0
    %150 = vmatpush1.bf16.msra.mxu0 0
    %151 = vmatprep.subr.bf16.mxu0 0
    %152 = vmatpush1.bf16.msra.mxu0 0
    %153 = vmatprep.subr.bf16.mxu0 0
    %154 = vmatpush1.bf16.msra.mxu0 0
    %155 = vmatprep.subr.bf16.mxu0 0
    %156 = vmatpush1.bf16.msra.mxu0 0
    %157 = vmatprep.mubr.bf16.mxu0 0
    %158 = vmatmul.mubr.bf16.gmra.mrb[0].mxu0 %v43
    %v159 = vpop.f32.mrb[0].mxu0
    %v160 = vadd.f32 0.0, %v159
    %v161 = vpop.f32.mrb[0].mxu0
    %v162 = vpop.f32.mrb[0].mxu0
    %v163 = vadd.f32 0.0, %v162
    %v164 = vpop.f32.mrb[0].mxu0
    %165 = vdwg.mxu0
    %v182 = vunpack.c.l.b16 %v44
    %v183 = vunpack.c.l.b16 %v45
    %v184 = vunpack.c.l.b16 %v46
    %v185 = vunpack.c.l.b16 %v47
    %v186 = vunpack.c.l.b16 %v48
    %v187 = vunpack.c.l.b16 %v49
    %v188 = vunpack.c.l.b16 %v50
    %v189 = vunpack.c.l.b16 %v51
    %v190 = vunpack.c.l.b16 %v52
    %v191 = vunpack.c.l.b16 %v53
    %v192 = vunpack.c.l.b16 %v54
    %v193 = vunpack.c.l.b16 %v55
    %v194 = vunpack.c.l.b16 %v56
    %v195 = vunpack.c.l.b16 %v57
    %v196 = vunpack.c.l.b16 %v58
    %v197 = vunpack.c.l.b16 %v59
    %v198 = vpack.c.b16 %v183, %v182
    %v199 = vpack.c.b16 %v185, %v184
    %v200 = vpack.c.b16 %v187, %v186
    %v201 = vpack.c.b16 %v189, %v188
    %v202 = vpack.c.b16 %v191, %v190
    %v203 = vpack.c.b16 %v193, %v192
    %v204 = vpack.c.b16 %v195, %v194
    %v205 = vpack.c.b16 %v197, %v196
    %214 = vmatprep.subr.bf16.mxu0 0
    %215 = vmatpush1.bf16.msra.mxu0 %v198
    %216 = vmatprep.subr.bf16.mxu0 0
    %217 = vmatpush1.bf16.msra.mxu0 %v199
    %218 = vmatprep.subr.bf16.mxu0 0
    %219 = vmatpush1.bf16.msra.mxu0 %v200
    %220 = vmatprep.subr.bf16.mxu0 0
    %221 = vmatpush1.bf16.msra.mxu0 %v201
    %222 = vmatprep.subr.bf16.mxu0 0
    %223 = vmatpush1.bf16.msra.mxu0 %v202
    %224 = vmatprep.subr.bf16.mxu0 0
    %225 = vmatpush1.bf16.msra.mxu0 %v203
    %226 = vmatprep.subr.bf16.mxu0 0
    %227 = vmatpush1.bf16.msra.mxu0 %v204
    %228 = vmatprep.subr.bf16.mxu0 0
    %229 = vmatpush1.bf16.msra.mxu0 %v205
    %230 = vmatprep.subr.bf16.mxu0 0
    %231 = vmatpush1.bf16.msra.mxu0 0
    %232 = vmatprep.subr.bf16.mxu0 0
    %233 = vmatpush1.bf16.msra.mxu0 0
    %234 = vmatprep.subr.bf16.mxu0 0
    %235 = vmatpush1.bf16.msra.mxu0 0
    %236 = vmatprep.subr.bf16.mxu0 0
    %237 = vmatpush1.bf16.msra.mxu0 0
    %238 = vmatprep.subr.bf16.mxu0 0
    %239 = vmatpush1.bf16.msra.mxu0 0
    %240 = vmatprep.subr.bf16.mxu0 0
    %241 = vmatpush1.bf16.msra.mxu0 0
    %242 = vmatprep.subr.bf16.mxu0 0
    %243 = vmatpush1.bf16.msra.mxu0 0
    %244 = vmatprep.subr.bf16.mxu0 0
    %245 = vmatpush1.bf16.msra.mxu0 0
    %246 = vmatprep.mubr.bf16.mxu0 0
    %247 = vmatmul.mubr.bf16.gmra.mrb[0].mxu0 %v43
    %v248 = vpop.f32.mrb[0].mxu0
    %v249 = vadd.f32 %v160, %v248
    %v250 = vpop.f32.mrb[0].mxu0
    %v251 = vpop.f32.mrb[0].mxu0
    %v252 = vadd.f32 %v163, %v251
    %v253 = vpop.f32.mrb[0].mxu0
    %254 = vdwg.mxu0
    %s255 = scalar_lea.vmem [#allocation2], 128
    %v256 = vld [vmem:[%s255] sm:$0xf]
    %v257 = vld [vmem:[%s255 + $0x4] sm:$0xf]
    %v258 = vld [vmem:[%s255 + $0x8] sm:$0xf]
    %v259 = vld [vmem:[%s255 + $0xc] sm:$0xf]
    %v260 = vld [vmem:[%s255 + $0x10] sm:$0xf]
    %v261 = vld [vmem:[%s255 + $0x14] sm:$0xf]
    %v262 = vld [vmem:[%s255 + $0x18] sm:$0xf]
    %v263 = vld [vmem:[%s255 + $0x1c] sm:$0xf]
    %v264 = vld [vmem:[%s255 + $0x20] sm:$0xf]
    %v265 = vld [vmem:[%s255 + $0x24] sm:$0xf]
    %v266 = vld [vmem:[%s255 + $0x28] sm:$0xf]
    %v267 = vld [vmem:[%s255 + $0x2c] sm:$0xf]
    %v268 = vld [vmem:[%s255 + $0x30] sm:$0xf]
    %v269 = vld [vmem:[%s255 + $0x34] sm:$0xf]
    %v270 = vld [vmem:[%s255 + $0x38] sm:$0xf]
    %v271 = vld [vmem:[%s255 + $0x3c] sm:$0xf]
    %v288 = vunpack.c.l.b16 %v256
    %v289 = vunpack.c.l.b16 %v257
    %v290 = vunpack.c.l.b16 %v258
    %v291 = vunpack.c.l.b16 %v259
    %v292 = vunpack.c.l.b16 %v260
    %v293 = vunpack.c.l.b16 %v261
    %v294 = vunpack.c.l.b16 %v262
    %v295 = vunpack.c.l.b16 %v263
    %v296 = vunpack.c.l.b16 %v264
    %v297 = vunpack.c.l.b16 %v265
    %v298 = vunpack.c.l.b16 %v266
    %v299 = vunpack.c.l.b16 %v267
    %v300 = vunpack.c.l.b16 %v268
    %v301 = vunpack.c.l.b16 %v269
    %v302 = vunpack.c.l.b16 %v270
    %v303 = vunpack.c.l.b16 %v271
    %v304 = vpack.c.b16 %v289, %v288
    %v305 = vpack.c.b16 %v291, %v290
    %v306 = vpack.c.b16 %v293, %v292
    %v307 = vpack.c.b16 %v295, %v294
    %v308 = vpack.c.b16 %v297, %v296
    %v309 = vpack.c.b16 %v299, %v298
    %v310 = vpack.c.b16 %v301, %v300
    %v311 = vpack.c.b16 %v303, %v302
    %320 = vmatprep.subr.bf16.mxu0 0
    %321 = vmatpush1.bf16.msra.mxu0 %v304
    %322 = vmatprep.subr.bf16.mxu0 0
    %323 = vmatpush1.bf16.msra.mxu0 %v305
    %324 = vmatprep.subr.bf16.mxu0 0
    %325 = vmatpush1.bf16.msra.mxu0 %v306
    %326 = vmatprep.subr.bf16.mxu0 0
    %327 = vmatpush1.bf16.msra.mxu0 %v307
    %328 = vmatprep.subr.bf16.mxu0 0
    %329 = vmatpush1.bf16.msra.mxu0 %v308
    %330 = vmatprep.subr.bf16.mxu0 0
    %331 = vmatpush1.bf16.msra.mxu0 %v309
    %332 = vmatprep.subr.bf16.mxu0 0
    %333 = vmatpush1.bf16.msra.mxu0 %v310
    %334 = vmatprep.subr.bf16.mxu0 0
    %335 = vmatpush1.bf16.msra.mxu0 %v311
    %336 = vmatprep.subr.bf16.mxu0 0
    %337 = vmatpush1.bf16.msra.mxu0 0
    %338 = vmatprep.subr.bf16.mxu0 0
    %339 = vmatpush1.bf16.msra.mxu0 0
    %340 = vmatprep.subr.bf16.mxu0 0
    %341 = vmatpush1.bf16.msra.mxu0 0
    %342 = vmatprep.subr.bf16.mxu0 0
    %343 = vmatpush1.bf16.msra.mxu0 0
    %344 = vmatprep.subr.bf16.mxu0 0
    %345 = vmatpush1.bf16.msra.mxu0 0
    %346 = vmatprep.subr.bf16.mxu0 0
    %347 = vmatpush1.bf16.msra.mxu0 0
    %348 = vmatprep.subr.bf16.mxu0 0
    %349 = vmatpush1.bf16.msra.mxu0 0
    %350 = vmatprep.subr.bf16.mxu0 0
    %351 = vmatpush1.bf16.msra.mxu0 0
    %352 = vmatprep.mubr.bf16.mxu0 0
    %353 = vmatmul.mubr.bf16.gmra.mrb[0].mxu0 %v43
    %v354 = vpop.f32.mrb[0].mxu0
    %v355 = vadd.f32 0.0, %v354
    %v356 = vpop.f32.mrb[0].mxu0
    %v357 = vpop.f32.mrb[0].mxu0
    %v358 = vadd.f32 0.0, %v357
    %v359 = vpop.f32.mrb[0].mxu0
    %360 = vdwg.mxu0
    %v361 = vadd.f32 %v249, %v355
    %v362 = vadd.f32 %v252, %v358
    %363 = vst [vmem:[#allocation5] sm:$0xff] %v361
    %364 = vst [vmem:[#allocation5 + $0x8] sm:$0xff] %v362
    // Predicated region
    $region14: #{tpu_custom_call.1} parent=1 // pred_check
      _
    $region15: #{tpu_custom_call.1} parent=1 // pred_check_branch
      %366 = sbr.rel (0) target = $region17
    $region16: #{tpu_custom_call.1} parent=1 // pred_region
      %s368 = ssub.s32 256, 256
      %369 = vsyncadd [#allocation4], %s368
      %s370 = sshll.u32 [#allocation5], 4
      %s371 = int_to_ptr.vmem [resolvable:$true] %s370
      %376 = dma.vmem_to_hbm [thread:$0]  %s371, 256, %s2, [#allocation4], 128, 128, 8
    $region17: #{tpu_custom_call.1} parent=1 // pred_fallthru
      _
    // Predicated region
    $region18: #{tpu_custom_call.1} parent=1 // pred_check
      _
    $region19: #{tpu_custom_call.1} parent=1 // pred_check_branch
      %378 = sbr.rel (0) target = $region21
    $region20: #{tpu_custom_call.1} parent=1 // pred_region
      %379 = dma.done [#allocation4], 256
    $region21: #{tpu_custom_call.1} parent=1 // pred_fallthru
      _
    %380 = vsyncpa [#allocation3], 1
    %381 = vsyncpa [#allocation4], 1

</llo_original>
